<compile_context>
chip_gen: v6e
topology: v6e:2x2x1
jax: 0.10.0
libtpu: 0.0.40
codegen_flags: <defaults>
</compile_context>

<pallas_src>
import jax
import jax.numpy as jnp
from jax.experimental import pallas as pl
from jax.experimental.pallas import tpu as pltpu


def gcn_kernel(h_ref, a_ref, dinv_full_ref, dinv_tile_ref, w_ref, b_ref,
               o_ref, hw_scr):
    r = pl.program_id(1)
    TL = a_ref.shape[1]

    # Compute the BN-folded linear output HW = H[b] @ W' + b' once per batch item
    # and keep it resident in VMEM scratch for all row tiles of this batch item.
    @pl.when(r == 0)
    def _():
        Hb = h_ref[0].astype(jnp.bfloat16)            # (L, C)
        Wp = w_ref[...].astype(jnp.bfloat16)          # (C, O_pad)
        hw_scr[...] = (jnp.dot(Hb, Wp, preferred_element_type=jnp.float32)
                       + b_ref[...])                  # (L, O_pad) f32

    # A_hat @ HW  ==  dinv_rows * (A_rows @ (dinv_cols * HW)) + HW_rows
    dinv_cols = dinv_full_ref[0]                      # (L, 1)  f32
    V = (hw_scr[...] * dinv_cols).astype(jnp.bfloat16)  # (L, O_pad)
    A_rows = a_ref[0].astype(jnp.bfloat16)            # (TL, L)
    acc = jnp.dot(A_rows, V, preferred_element_type=jnp.float32)  # (TL, O_pad)

    row_start = pl.multiple_of(r * TL, TL)
    hw_rows = hw_scr[pl.ds(row_start, TL), :]         # (TL, O_pad) identity term
    dinv_rows = dinv_tile_ref[0]                      # (TL, 1)

    out = dinv_rows * acc + hw_rows
    o_ref[0] = jnp.where(out >= 0, out, 0.01 * out)   # LeakyReLU(0.01)


def _pick_row_tile(L, max_tile=256):
    """Largest row tile <= max_tile that divides L and is a multiple of 8."""
    if L % 8 != 0:
        return L
    for t in range(min(max_tile, L), 7, -8):
        if L % t == 0:
            return t
    return L


def gcn_layer(H, A, gamma, beta, W, b, *, eps=1e-5, row_tile=None):
    H = H.astype(jnp.float32)
    A = A.astype(jnp.float32)
    B, L, C = H.shape
    O = W.shape[1]
    O_pad = ((O + 127) // 128) * 128

    # --- Fold BatchNorm1d (training-mode batch stats, biased variance) into W/b. ---
    mean = jnp.mean(H, axis=(0, 1))                              # (C,)
    var = jnp.mean((H - mean) ** 2, axis=(0, 1))                 # biased
    scale = gamma.reshape(-1) * jax.lax.rsqrt(var + eps)         # gamma / sqrt(var+eps)
    shift = beta.reshape(-1) - mean * scale
    Wp = W.astype(jnp.float32) * scale[:, None]                  # (C, O)
    bp = b.reshape(1, O).astype(jnp.float32) + shift[None, :] @ W.astype(jnp.float32)

    # Lane-dense (multiple-of-128) output width: pad W'/b', slice the result back.
    Wp = jnp.pad(Wp, ((0, 0), (0, O_pad - O)))
    bp = jnp.pad(bp, ((0, 0), (0, O_pad - O)))

    # --- D^-1/2 (same semantics as torch.pow(A.sum(2), -0.5)). ---
    dinv3 = jax.lax.rsqrt(jnp.sum(A, axis=2))[:, :, None]        # (B, L, 1)

    TL = row_tile or _pick_row_tile(L)
    assert L % TL == 0
    grid = (B, L // TL)

    out = pl.pallas_call(
        gcn_kernel,
        out_shape=jax.ShapeDtypeStruct((B, L, O_pad), jnp.float32),
        grid=grid,
        in_specs=[
            pl.BlockSpec((1, L, C), lambda bi, ri: (bi, 0, 0)),     # H[b]   (resident per b)
            pl.BlockSpec((1, TL, L), lambda bi, ri: (bi, ri, 0)),   # A row tile
            pl.BlockSpec((1, L, 1), lambda bi, ri: (bi, 0, 0)),     # dinv (all columns)
            pl.BlockSpec((1, TL, 1), lambda bi, ri: (bi, ri, 0)),   # dinv (tile rows)
            pl.BlockSpec((C, O_pad), lambda bi, ri: (0, 0)),        # W' (BN-folded)
            pl.BlockSpec((1, O_pad), lambda bi, ri: (0, 0)),        # b' (BN-folded)
        ],
        out_specs=pl.BlockSpec((1, TL, O_pad), lambda bi, ri: (bi, ri, 0)),
        scratch_shapes=[pltpu.VMEM((L, O_pad), jnp.float32)],       # HW per batch item
        compiler_params=pltpu.CompilerParams(
            dimension_semantics=("parallel", "arbitrary")),
        cost_estimate=pl.CostEstimate(
            flops=2 * B * L * L * O_pad + 2 * B * L * C * O_pad,
            transcendentals=0,
            bytes_accessed=4 * (B * L * L + B * L * C + B * L * O_pad
                                + C * O_pad + 2 * B * L),
        ),
    )(H, A, dinv3, dinv3, Wp, bp)

    return out[..., :O]


def reference(H, A, gamma, beta, W, b):
    mean = jnp.mean(H, axis=(0, 1), keepdims=True)
    var = jnp.mean((H - mean) ** 2, axis=(0, 1), keepdims=True)
    Hn = (H - mean) / jnp.sqrt(var + 1e-5) * gamma[None] + beta[None]
    HW = jnp.einsum("blc,co->blo", Hn, W) + b[None]
    d = jnp.sum(A, axis=2)
    dinv = d ** -0.5
    A_hat = A * dinv[:, :, None] * dinv[:, None, :] + jnp.eye(A.shape[1])[None]
    out = jnp.einsum("bij,bjo->bio", A_hat, HW)
    return jnp.where(out >= 0, out, 0.01 * out)


if __name__ == "__main__":
    # small shapes: batch=2, nodes(l)=8, input_dim=32, output_dim=16
    B, L, C, O = 2, 8, 32, 16
    key = jax.random.PRNGKey(0)
    k1, k2, k3, k4 = jax.random.split(key, 4)

    H = jax.random.normal(k1, (B, L, C), dtype=jnp.float32)
    A_raw = jax.random.uniform(k2, (B, L, L), dtype=jnp.float32)
    A = 0.5 * (A_raw + jnp.transpose(A_raw, (0, 2, 1)))  # symmetric, nonneg degrees

    # parameters (deterministic init, PyTorch-style)
    gamma = jnp.ones((1, C), dtype=jnp.float32)   # BatchNorm1d weight default
    beta = jnp.zeros((1, C), dtype=jnp.float32)   # BatchNorm1d bias default
    lim = 1.0 / jnp.sqrt(jnp.float32(C))
    W = jax.random.uniform(k3, (C, O), minval=-lim, maxval=lim, dtype=jnp.float32)
    b = jax.random.uniform(k4, (1, O), minval=-lim, maxval=lim, dtype=jnp.float32)

    out = gcn_layer(H, A, gamma, beta, W, b)
    jax.block_until_ready(out)

    ref = reference(H, A, gamma, beta, W, b)
    assert out.shape == (B, L, O)
    assert jnp.max(jnp.abs(out - ref)) < 2e-2, float(jnp.max(jnp.abs(out - ref)))

    print("KERNEL_OK")
</pallas_src>

<mosaic_0001>
module attributes {stable_mosaic.version = 11 : i64} {
  func.func @gcn_kernel(%arg0: i32, %arg1: i32, %arg2: memref<1x8x32xf32, #tpu.memory_space<vmem>>, %arg3: memref<1x8x8xf32, #tpu.memory_space<vmem>>, %arg4: memref<1x8x1xf32, #tpu.memory_space<vmem>>, %arg5: memref<1x8x1xf32, #tpu.memory_space<vmem>>, %arg6: memref<32x128xf32, #tpu.memory_space<vmem>>, %arg7: memref<1x128xf32, #tpu.memory_space<vmem>>, %arg8: memref<1x8x128xf32, #tpu.memory_space<vmem>>, %arg9: memref<8x128xf32, #tpu.memory_space<vmem>>) attributes {dimension_semantics = [#tpu.dimension_semantics<parallel>, #tpu.dimension_semantics<arbitrary>], iteration_bounds = array<i64: 2, 1>, scalar_prefetch = 0 : i64, scratch_operands = 1 : i64, tpu.core_type = #tpu.core_type<tc>, window_params = [{transform_indices = @transform_0, window_bounds = array<i64: 1, 8, 32>}, {transform_indices = @transform_1, window_bounds = array<i64: 1, 8, 8>}, {transform_indices = @transform_2, window_bounds = array<i64: 1, 8, 1>}, {transform_indices = @transform_3, window_bounds = array<i64: 1, 8, 1>}, {pipeline_mode = #tpu.pipeline_mode<synchronous>, transform_indices = @transform_4, window_bounds = array<i64: 32, 128>}, {pipeline_mode = #tpu.pipeline_mode<synchronous>, transform_indices = @transform_5, window_bounds = array<i64: 1, 128>}, {transform_indices = @transform_6, window_bounds = array<i64: 1, 8, 128>}]} {
    %c0_i32 = arith.constant 0 : i32
    %0 = arith.cmpi eq, %arg1, %c0_i32 : i32
    %1 = arith.extui %0 : i1 to i32
    %c0_i32_0 = arith.constant 0 : i32
    %2 = arith.cmpi ne, %1, %c0_i32_0 : i32
    scf.if %2 {
      %c0_17 = arith.constant 0 : index
      %c0_18 = arith.constant 0 : index
      %c0_19 = arith.constant 0 : index
      %30 = vector.load %arg2[%c0_17, %c0_18, %c0_19] : memref<1x8x32xf32, #tpu.memory_space<vmem>>, vector<1x8x32xf32>
      %31 = vector.shape_cast %30 : vector<1x8x32xf32> to vector<8x32xf32>
      %32 = arith.truncf %31 : vector<8x32xf32> to vector<8x32xbf16>
      %c0_20 = arith.constant 0 : index
      %c0_21 = arith.constant 0 : index
      %33 = vector.load %arg6[%c0_20, %c0_21] : memref<32x128xf32, #tpu.memory_space<vmem>>, vector<32x128xf32>
      %34 = arith.truncf %33 : vector<32x128xf32> to vector<32x128xbf16>
      %cst_22 = arith.constant dense<0.000000e+00> : vector<8x128xf32>
      %35 = tpu.matmul %32, %34, %cst_22 {dimension_numbers = #tpu.dot_dimension_numbers<[1], [0], [0], [1], [0, 0, 1, 1], [], []>} : vector<8x32xbf16>, vector<32x128xbf16>, vector<8x128xf32> -> vector<8x128xf32>
      %c0_23 = arith.constant 0 : index
      %c0_24 = arith.constant 0 : index
      %36 = vector.load %arg7[%c0_23, %c0_24] : memref<1x128xf32, #tpu.memory_space<vmem>>, vector<1x128xf32>
      %37 = vector.broadcast %36 : vector<1x128xf32> to vector<8x128xf32>
      %38 = arith.addf %35, %37 : vector<8x128xf32>
      %c0_25 = arith.constant 0 : index
      %c0_26 = arith.constant 0 : index
      %39 = vector.load %arg9[%c0_25, %c0_26] : memref<8x128xf32, #tpu.memory_space<vmem>>, vector<8x128xf32>
      tpu.vector_store %arg9[%c0_25, %c0_26], %38 {strides = array<i32>} : memref<8x128xf32, #tpu.memory_space<vmem>>, vector<8x128xf32>,
    } else {
    }
    %c0 = arith.constant 0 : index
    %c0_1 = arith.constant 0 : index
    %c0_2 = arith.constant 0 : index
    %3 = vector.load %arg4[%c0, %c0_1, %c0_2] : memref<1x8x1xf32, #tpu.memory_space<vmem>>, vector<1x8x1xf32>
    %4 = vector.shape_cast %3 : vector<1x8x1xf32> to vector<8x1xf32>
    %c0_3 = arith.constant 0 : index
    %c0_4 = arith.constant 0 : index
    %5 = vector.load %arg9[%c0_3, %c0_4] : memref<8x128xf32, #tpu.memory_space<vmem>>, vector<8x128xf32>
    %6 = vector.broadcast %4 : vector<8x1xf32> to vector<8x128xf32>
    %7 = arith.mulf %5, %6 : vector<8x128xf32>
    %8 = arith.truncf %7 : vector<8x128xf32> to vector<8x128xbf16>
    %c0_5 = arith.constant 0 : index
    %c0_6 = arith.constant 0 : index
    %c0_7 = arith.constant 0 : index
    %9 = vector.load %arg3[%c0_5, %c0_6, %c0_7] : memref<1x8x8xf32, #tpu.memory_space<vmem>>, vector<1x8x8xf32>
    %10 = vector.shape_cast %9 : vector<1x8x8xf32> to vector<8x8xf32>
    %11 = arith.truncf %10 : vector<8x8xf32> to vector<8x8xbf16>
    %cst = arith.constant dense<0.000000e+00> : vector<8x128xf32>
    %12 = tpu.matmul %11, %8, %cst {dimension_numbers = #tpu.dot_dimension_numbers<[1], [0], [0], [1], [0, 0, 1, 1], [], []>} : vector<8x8xbf16>, vector<8x128xbf16>, vector<8x128xf32> -> vector<8x128xf32>
    %c8_i32 = arith.constant 8 : i32
    %13 = arith.muli %arg1, %c8_i32 : i32
    %14 = tpu.assume_multiple %13, 8 : i32
    %15 = arith.index_cast %14 : i32 to index
    %c0_8 = arith.constant 0 : index
    %16 = vector.load %arg9[%15, %c0_8] : memref<8x128xf32, #tpu.memory_space<vmem>>, vector<8x128xf32>
    %c0_9 = arith.constant 0 : index
    %c0_10 = arith.constant 0 : index
    %c0_11 = arith.constant 0 : index
    %17 = vector.load %arg5[%c0_9, %c0_10, %c0_11] : memref<1x8x1xf32, #tpu.memory_space<vmem>>, vector<1x8x1xf32>
    %18 = vector.shape_cast %17 : vector<1x8x1xf32> to vector<8x1xf32>
    %19 = vector.broadcast %18 : vector<8x1xf32> to vector<8x128xf32>
    %20 = arith.mulf %19, %12 : vector<8x128xf32>
    %21 = arith.addf %20, %16 : vector<8x128xf32>
    %cst_12 = arith.constant 0.000000e+00 : f32
    %22 = vector.broadcast %cst_12 : f32 to vector<8x128xf32>
    %23 = arith.cmpf oge, %21, %22 : vector<8x128xf32>
    %cst_13 = arith.constant 0.00999999977 : f32
    %24 = vector.broadcast %cst_13 : f32 to vector<8x128xf32>
    %25 = arith.mulf %24, %21 : vector<8x128xf32>
    %26 = arith.select %23, %21, %25 : vector<8x128xi1>, vector<8x128xf32>
    %c0_14 = arith.constant 0 : index
    %c0_15 = arith.constant 0 : index
    %c0_16 = arith.constant 0 : index
    %27 = vector.load %arg8[%c0_14, %c0_15, %c0_16] : memref<1x8x128xf32, #tpu.memory_space<vmem>>, vector<1x8x128xf32>
    %28 = vector.shape_cast %27 : vector<1x8x128xf32> to vector<8x128xf32>
    %29 = vector.shape_cast %26 : vector<8x128xf32> to vector<1x8x128xf32>
    tpu.vector_store %arg8[%c0_14, %c0_15, %c0_16], %29 {strides = array<i32>} : memref<1x8x128xf32, #tpu.memory_space<vmem>>, vector<1x8x128xf32>,
    return
  }
  func.func @transform_0(%arg0: i32, %arg1: i32) -> (i32, i32, i32) {
    %c0_i32 = arith.constant 0 : i32
    %c0_i32_0 = arith.constant 0 : i32
    %c0_i32_1 = arith.constant 0 : i32
    return %arg0, %c0_i32, %c0_i32_0 : i32, i32, i32
  }
  func.func @transform_1(%arg0: i32, %arg1: i32) -> (i32, i32, i32) {
    %c0_i32 = arith.constant 0 : i32
    %c0_i32_0 = arith.constant 0 : i32
    return %arg0, %arg1, %c0_i32 : i32, i32, i32
  }
  func.func @transform_2(%arg0: i32, %arg1: i32) -> (i32, i32, i32) {
    %c0_i32 = arith.constant 0 : i32
    %c0_i32_0 = arith.constant 0 : i32
    %c0_i32_1 = arith.constant 0 : i32
    return %arg0, %c0_i32, %c0_i32_0 : i32, i32, i32
  }
  func.func @transform_3(%arg0: i32, %arg1: i32) -> (i32, i32, i32) {
    %c0_i32 = arith.constant 0 : i32
    %c0_i32_0 = arith.constant 0 : i32
    return %arg0, %arg1, %c0_i32 : i32, i32, i32
  }
  func.func @transform_4(%arg0: i32, %arg1: i32) -> (i32, i32) {
    %c0_i32 = arith.constant 0 : i32
    %c0_i32_0 = arith.constant 0 : i32
    %c0_i32_1 = arith.constant 0 : i32
    return %c0_i32, %c0_i32_0 : i32, i32
  }
  func.func @transform_5(%arg0: i32, %arg1: i32) -> (i32, i32) {
    %c0_i32 = arith.constant 0 : i32
    %c0_i32_0 = arith.constant 0 : i32
    %c0_i32_1 = arith.constant 0 : i32
    return %c0_i32, %c0_i32_0 : i32, i32
  }
  func.func @transform_6(%arg0: i32, %arg1: i32) -> (i32, i32, i32) {
    %c0_i32 = arith.constant 0 : i32
    %c0_i32_0 = arith.constant 0 : i32
    return %arg0, %arg1, %c0_i32 : i32, i32, i32
  }
}

</mosaic_0001>

<llo_original>
// kernel: tpu_custom_call.1
$region0: #{tpu_custom_call.1}
  #allocation0 [shape = 'u32[]', space=smem, size = 0x4, offset = 0x4, fixed_abs, tag = 'smem constant byte address 0x4 - core index']
  #allocation1 [shape = 'u32[144,128]{1,0:T(1,128)}', space=vmem, size = 0x12000, scoped, tag = 'internal scratch']
  #allocation2 [shape = 'f32[8,128]{1,0:T(8,128)}', space=vmem, size = 0x1000, scoped, tag = 'scratch operand']
  %s0 = inlined_call_operand.hbm [shape: f32[2,8,32], index: 0, kind: input, shape index: {}]
  %s1 = inlined_call_operand.hbm [shape: f32[2,8,8], index: 1, kind: input, shape index: {}]
  %s2 = inlined_call_operand.vmem [shape: f32[2,8,1], index: 2, kind: input, shape index: {}]
  %s3 = inlined_call_operand.vmem [shape: f32[2,8,1], index: 3, kind: input, shape index: {}]
  %s4 = inlined_call_operand.vmem [shape: f32[32,128], index: 4, kind: input, shape index: {}]
  %s5 = inlined_call_operand.vmem [shape: f32[1,128], index: 5, kind: input, shape index: {}]
  %s6 = inlined_call_operand.hbm [shape: f32[2,8,128], index: 6, kind: output, shape index: {}]
  %s7 = sld [smem:[#allocation0]]
  $region69: #{tpu_custom_call.1} parent=0
    _
  %s9 = ssub.s32 1, %s7
  %s10 = scalar_select 0, %s9, %s7
  $region1: #{tpu_custom_call.1} parent=0
    #allocation3 [shape = 'u8[8192]{0}', space=vmem, size = 0x2000, scoped, tag = 'input window, operand 0']
    #allocation4 [shape = 's32[2]{0}', space=sflag, size = 0x8, scoped, tag = 'scoped memory for tpu_custom_call.1']
    #allocation5 [shape = 's32[2]{0}', space=sflag, size = 0x8, scoped, tag = 'scoped memory for tpu_custom_call.1']
    #allocation6 [shape = 'u8[8192]{0}', space=vmem, size = 0x2000, scoped, tag = 'input window, operand 1']
    #allocation7 [shape = 's32[2]{0}', space=sflag, size = 0x8, scoped, tag = 'scoped memory for tpu_custom_call.1']
    #allocation8 [shape = 'u8[8192]{0}', space=vmem, size = 0x2000, scoped, tag = 'output window, operand 0']
    %11 = vsyncpa [#allocation4], 0
    %s12 = scalar_lea.sflag [#allocation4], 1
    %13 = vsyncpa %s12, 0
    %14 = vsyncpa [#allocation7], 0
    %s15 = scalar_lea.sflag [#allocation7], 1
    %16 = vsyncpa %s15, 0
    %17 = vsyncpa [#allocation5], 0
    %s18 = scalar_lea.sflag [#allocation5], 1
    %19 = vsyncpa %s18, 0
    loop: start=0, step=1, limit=4
    $region2: #{tpu_custom_call.1} parent=1 // loop_pre_header
      _
    $region3: #{tpu_custom_call.1} parent=1 // loop_header
      %s21 = sphi 0, %s25
      %p22 = scmp.ge.s32.totalorder %s21, 4
      %s28 = sphi 0, %s40
      %s29 = sphi 0, %s36
      %s30 = sphi 0, %s28
      %s31 = sphi 0, %s29
      %s32 = sphi 0, %s30
      %s33 = sphi 0, %s31
      %s43 = sphi 0, %s45
      %s46 = sphi 0, %s43
      %s47 = sphi 0, %s46
      %s63 = sphi 0, %s47
      %s71 = sphi 0, %s73
      %s74 = sphi 0, %s71
      %s75 = sphi 0, %s74
      %s91 = sphi 0, %s75
      %s97 = sphi 0, %s99
      %s100 = sphi 0, %s97
      %s101 = sphi 0, %s100
      %s117 = sphi 0, %s101
      %s125 = sphi 0, %s127
      %s128 = sphi 0, %s125
      %s129 = sphi 0, %s128
      %s145 = sphi 0, %s129
      %s149 = sphi 0, %s149
      %s151 = sphi 0, %s149
      %s152 = sphi 0, %s151
      %s166 = sphi 0, %s152
      %s170 = sphi 0, %s170
      %s172 = sphi 0, %s170
      %s173 = sphi 0, %s172
      %s187 = sphi 0, %s173
      %s195 = sphi 0, %s197
      %s198 = sphi 0, %s195
      %s199 = sphi 0, %s198
      %s215 = sphi 0, %s199
    $region4: #{tpu_custom_call.1} parent=1 // loop_header_branch
      %24 = sbr.rel (%p22) target = $region8
    $region5: #{tpu_custom_call.1} parent=1 // loop_body
      %s26 = ssub.s32 %s21, 1
      %s27 = ssub.s32 %s21, 2
      %s34 = sadd.s32 1, %s29
      %p35 = scmp.ge.s32.totalorder %s34, 1
      %s36 = scalar_select %p35, 0, %s34
      %s37 = sadd.s32 1, %s28
      %s38 = scalar_select %p35, %s37, %s28
      %p39 = scmp.ge.s32.totalorder %s38, 2
      %s40 = scalar_select %p39, 0, %s38
      %s41 = ssub.s32 %s28, %s40
      %p42 = scmp.eq.s32.totalorder %s41, 0
      %s44 = sadd.s32 %s43, 1
      %s45 = scalar_select %p42, %s43, %s44
      %p48 = pneg %p42
      %p49 = scmp.eq.s32.totalorder %s21, 1
      %p50 = por %p48, %p49
      %p51 = scmp.ne.s32.totalorder %s43, %s46
      %p52 = scmp.eq.s32.totalorder %s21, 0
      %p53 = por %p51, %p52
      %p54 = scmp.ne.s32.totalorder %s43, %s46
      %p55 = scmp.eq.s32.totalorder %s26, 1
      %p56 = por %p54, %p55
      %p57 = scmp.ne.s32.totalorder %s46, %s47
      %p58 = scmp.eq.s32.totalorder %s26, 0
      %p59 = por %p57, %p58
      %p60 = scmp.ne.s32.totalorder %s46, %s47
      %p61 = scmp.eq.s32.totalorder %s27, 1
      %p62 = por %p60, %p61
      %p64 = scmp.ne.s32.totalorder %s47, %s63
      %p65 = scmp.eq.s32.totalorder %s27, 0
      %p66 = por %p64, %p65
      %s67 = ssub.s32 %s28, %s40
      %s68 = ssub.s32 %s29, %s36
      %s69 = sor.u32 %s67, %s68
      %p70 = scmp.eq.s32.totalorder %s69, 0
      %s72 = sadd.s32 %s71, 1
      %s73 = scalar_select %p70, %s71, %s72
      %p76 = pneg %p70
      %p77 = scmp.eq.s32.totalorder %s21, 1
      %p78 = por %p76, %p77
      %p79 = scmp.ne.s32.totalorder %s71, %s74
      %p80 = scmp.eq.s32.totalorder %s21, 0
      %p81 = por %p79, %p80
      %p82 = scmp.ne.s32.totalorder %s71, %s74
      %p83 = scmp.eq.s32.totalorder %s26, 1
      %p84 = por %p82, %p83
      %p85 = scmp.ne.s32.totalorder %s74, %s75
      %p86 = scmp.eq.s32.totalorder %s26, 0
      %p87 = por %p85, %p86
      %p88 = scmp.ne.s32.totalorder %s74, %s75
      %p89 = scmp.eq.s32.totalorder %s27, 1
      %p90 = por %p88, %p89
      %p92 = scmp.ne.s32.totalorder %s75, %s91
      %p93 = scmp.eq.s32.totalorder %s27, 0
      %p94 = por %p92, %p93
      %s95 = ssub.s32 %s28, %s40
      %p96 = scmp.eq.s32.totalorder %s95, 0
      %s98 = sadd.s32 %s97, 1
      %s99 = scalar_select %p96, %s97, %s98
      %p102 = pneg %p96
      %p103 = scmp.eq.s32.totalorder %s21, 1
      %p104 = por %p102, %p103
      %p105 = scmp.ne.s32.totalorder %s97, %s100
      %p106 = scmp.eq.s32.totalorder %s21, 0
      %p107 = por %p105, %p106
      %p108 = scmp.ne.s32.totalorder %s97, %s100
      %p109 = scmp.eq.s32.totalorder %s26, 1
      %p110 = por %p108, %p109
      %p111 = scmp.ne.s32.totalorder %s100, %s101
      %p112 = scmp.eq.s32.totalorder %s26, 0
      %p113 = por %p111, %p112
      %p114 = scmp.ne.s32.totalorder %s100, %s101
      %p115 = scmp.eq.s32.totalorder %s27, 1
      %p116 = por %p114, %p115
      %p118 = scmp.ne.s32.totalorder %s101, %s117
      %p119 = scmp.eq.s32.totalorder %s27, 0
      %p120 = por %p118, %p119
      %s121 = ssub.s32 %s28, %s40
      %s122 = ssub.s32 %s29, %s36
      %s123 = sor.u32 %s121, %s122
      %p124 = scmp.eq.s32.totalorder %s123, 0
      %s126 = sadd.s32 %s125, 1
      %s127 = scalar_select %p124, %s125, %s126
      %p130 = pneg %p124
      %p131 = scmp.eq.s32.totalorder %s21, 1
      %p132 = por %p130, %p131
      %p133 = scmp.ne.s32.totalorder %s125, %s128
      %p134 = scmp.eq.s32.totalorder %s21, 0
      %p135 = por %p133, %p134
      %p136 = scmp.ne.s32.totalorder %s125, %s128
      %p137 = scmp.eq.s32.totalorder %s26, 1
      %p138 = por %p136, %p137
      %p139 = scmp.ne.s32.totalorder %s128, %s129
      %p140 = scmp.eq.s32.totalorder %s26, 0
      %p141 = por %p139, %p140
      %p142 = scmp.ne.s32.totalorder %s128, %s129
      %p143 = scmp.eq.s32.totalorder %s27, 1
      %p144 = por %p142, %p143
      %p146 = scmp.ne.s32.totalorder %s129, %s145
      %p147 = scmp.eq.s32.totalorder %s27, 0
      %p148 = por %p146, %p147
      %s150 = sadd.s32 %s149, 1
      %p153 = scmp.eq.s32.totalorder %s21, 1
      %p154 = scmp.ne.s32.totalorder %s149, %s151
      %p155 = scmp.eq.s32.totalorder %s21, 0
      %p156 = por %p154, %p155
      %p157 = scmp.ne.s32.totalorder %s149, %s151
      %p158 = scmp.eq.s32.totalorder %s26, 1
      %p159 = por %p157, %p158
      %p160 = scmp.ne.s32.totalorder %s151, %s152
      %p161 = scmp.eq.s32.totalorder %s26, 0
      %p162 = por %p160, %p161
      %p163 = scmp.ne.s32.totalorder %s151, %s152
      %p164 = scmp.eq.s32.totalorder %s27, 1
      %p165 = por %p163, %p164
      %p167 = scmp.ne.s32.totalorder %s152, %s166
      %p168 = scmp.eq.s32.totalorder %s27, 0
      %p169 = por %p167, %p168
      %s171 = sadd.s32 %s170, 1
      %p174 = scmp.eq.s32.totalorder %s21, 1
      %p175 = scmp.ne.s32.totalorder %s170, %s172
      %p176 = scmp.eq.s32.totalorder %s21, 0
      %p177 = por %p175, %p176
      %p178 = scmp.ne.s32.totalorder %s170, %s172
      %p179 = scmp.eq.s32.totalorder %s26, 1
      %p180 = por %p178, %p179
      %p181 = scmp.ne.s32.totalorder %s172, %s173
      %p182 = scmp.eq.s32.totalorder %s26, 0
      %p183 = por %p181, %p182
      %p184 = scmp.ne.s32.totalorder %s172, %s173
      %p185 = scmp.eq.s32.totalorder %s27, 1
      %p186 = por %p184, %p185
      %p188 = scmp.ne.s32.totalorder %s173, %s187
      %p189 = scmp.eq.s32.totalorder %s27, 0
      %p190 = por %p188, %p189
      %s191 = ssub.s32 %s28, %s40
      %s192 = ssub.s32 %s29, %s36
      %s193 = sor.u32 %s191, %s192
      %p194 = scmp.eq.s32.totalorder %s193, 0
      %s196 = sadd.s32 %s195, 1
      %s197 = scalar_select %p194, %s195, %s196
      %p200 = pneg %p194
      %p201 = scmp.eq.s32.totalorder %s21, 1
      %p202 = por %p200, %p201
      %p203 = scmp.ne.s32.totalorder %s195, %s198
      %p204 = scmp.eq.s32.totalorder %s21, 0
      %p205 = por %p203, %p204
      %p206 = scmp.ne.s32.totalorder %s195, %s198
      %p207 = scmp.eq.s32.totalorder %s26, 1
      %p208 = por %p206, %p207
      %p209 = scmp.ne.s32.totalorder %s198, %s199
      %p210 = scmp.eq.s32.totalorder %s26, 0
      %p211 = por %p209, %p210
      %p212 = scmp.ne.s32.totalorder %s198, %s199
      %p213 = scmp.eq.s32.totalorder %s27, 1
      %p214 = por %p212, %p213
      %p216 = scmp.ne.s32.totalorder %s199, %s215
      %p217 = scmp.eq.s32.totalorder %s27, 0
      %p218 = por %p216, %p217
      %p219 = scmp.le.s32.totalorder 1, %s21
      %p220 = scmp.lt.s32.totalorder %s21, 3
      %p221 = pnand %p219, %p220
      %p222 = pneg %p221
      // Predicated region
      $region9: #{tpu_custom_call.1} parent=5 // pred_check
        _
      $region10: #{tpu_custom_call.1} parent=5 // pred_check_branch
        %224 = sbr.rel (%p221) target = $region12
      $region11: #{tpu_custom_call.1} parent=5 // pred_region
        %s225 = ssub.s32 %s21, 1
        // Predicated region
        $region13: #{tpu_custom_call.1} parent=11 // pred_check
          %p226 = pneg %p162
        $region14: #{tpu_custom_call.1} parent=11 // pred_check_branch
          %228 = sbr.rel (%p226) target = $region16
        $region15: #{tpu_custom_call.1} parent=11 // pred_region
          _
        $region16: #{tpu_custom_call.1} parent=11 // pred_fallthru
          _
        // Predicated region
        $region17: #{tpu_custom_call.1} parent=11 // pred_check
          %p229 = pneg %p183
        $region18: #{tpu_custom_call.1} parent=11 // pred_check_branch
          %231 = sbr.rel (%p229) target = $region20
        $region19: #{tpu_custom_call.1} parent=11 // pred_region
          _
        $region20: #{tpu_custom_call.1} parent=11 // pred_fallthru
          _
      $region12: #{tpu_custom_call.1} parent=5 // pred_fallthru
        _
      %p232 = scmp.lt.s32.totalorder %s21, 2
      // Predicated region
      $region21: #{tpu_custom_call.1} parent=5 // pred_check
        %p233 = pneg %p232
      $region22: #{tpu_custom_call.1} parent=5 // pred_check_branch
        %235 = sbr.rel (%p233) target = $region24
      $region23: #{tpu_custom_call.1} parent=5 // pred_region
        // Predicated region
        $region25: #{tpu_custom_call.1} parent=23 // pred_check
          %p236 = pneg %p53
        $region26: #{tpu_custom_call.1} parent=23 // pred_check_branch
          %238 = sbr.rel (%p236) target = $region28
        $region27: #{tpu_custom_call.1} parent=23 // pred_region
          %s239 = sand.u32 %s43, 1
          %s240 = scalar_lea.sflag [#allocation4], %s239
          %s241 = sand.u32 %s43, 1
          %s242 = smul.addr %s241, 8
          %s243 = scalar_lea.vmem [#allocation3], %s242
          %s245 = ssub.s32 128, 128
          %246 = vsyncadd %s240, %s245
          %s247 = smul.addr %s28, 128
          %s248 = scalar_lea.hbm %s0, %s247
          %s250 = sshll.u32 %s243, 4
          %s251 = int_to_ptr.vmem [resolvable:$true] %s250
          %253 = dma.hbm_to_vmem [thread:$0]  %s248, 128, %s251, %s240
        $region28: #{tpu_custom_call.1} parent=23 // pred_fallthru
          _
        // Predicated region
        $region29: #{tpu_custom_call.1} parent=23 // pred_check
          %p254 = pneg %p81
        $region30: #{tpu_custom_call.1} parent=23 // pred_check_branch
          %256 = sbr.rel (%p254) target = $region32
        $region31: #{tpu_custom_call.1} parent=23 // pred_region
          %s257 = sand.u32 %s71, 1
          %s258 = scalar_lea.sflag [#allocation7], %s257
          %s259 = sand.u32 %s71, 1
          %s260 = smul.addr %s259, 8
          %s261 = scalar_lea.vmem [#allocation6], %s260
          %s263 = ssub.s32 128, 128
          %264 = vsyncadd %s258, %s263
          %s265 = sadd.s32 %s29, %s28
          %s266 = smul.addr %s265, 128
          %s267 = scalar_lea.hbm %s1, %s266
          %s269 = sshll.u32 %s261, 4
          %s270 = int_to_ptr.vmem [resolvable:$true] %s269
          %272 = dma.hbm_to_vmem [thread:$0]  %s267, 128, %s270, %s258
        $region32: #{tpu_custom_call.1} parent=23 // pred_fallthru
          _
        // Predicated region
        $region33: #{tpu_custom_call.1} parent=23 // pred_check
          %p273 = pneg %p107
        $region34: #{tpu_custom_call.1} parent=23 // pred_check_branch
          %275 = sbr.rel (%p273) target = $region36
        $region35: #{tpu_custom_call.1} parent=23 // pred_region
          %p276 = scmp.lt.s32.totalorder %s28, 1
          %s277 = scalar_select %p276, %s28, 1
          %s278 = smul.addr %s277, 8
          %s279 = scalar_lea.vmem %s2, %s278
        $region36: #{tpu_custom_call.1} parent=23 // pred_fallthru
          _
        // Predicated region
        $region37: #{tpu_custom_call.1} parent=23 // pred_check
          %p280 = pneg %p135
        $region38: #{tpu_custom_call.1} parent=23 // pred_check_branch
          %282 = sbr.rel (%p280) target = $region40
        $region39: #{tpu_custom_call.1} parent=23 // pred_region
          %p283 = scmp.lt.s32.totalorder %s28, 1
          %s284 = scalar_select %p283, %s28, 1
          %p285 = scmp.lt.s32.totalorder %s29, 0
          %s286 = scalar_select %p285, %s29, 0
          %s287 = sadd.s32 %s286, %s284
          %s288 = smul.addr %s287, 8
          %s289 = scalar_lea.vmem %s3, %s288
        $region40: #{tpu_custom_call.1} parent=23 // pred_fallthru
          _
      $region24: #{tpu_custom_call.1} parent=5 // pred_fallthru
        _
      %p290 = scmp.le.s32.totalorder 1, %s21
      %p291 = scmp.lt.s32.totalorder %s21, 3
      %p292 = pnand %p290, %p291
      %p293 = pneg %p292
      // Predicated region
      $region41: #{tpu_custom_call.1} parent=5 // pred_check
        _
      $region42: #{tpu_custom_call.1} parent=5 // pred_check_branch
        %295 = sbr.rel (%p292) target = $region44
      $region43: #{tpu_custom_call.1} parent=5 // pred_region
        %s296 = ssub.s32 %s21, 1
        %s297 = sand.u32 %s46, 1
        %s298 = scalar_lea.sflag [#allocation4], %s297
        %s299 = sand.u32 %s46, 1
        %s300 = smul.addr %s299, 8
        %s301 = scalar_lea.vmem [#allocation3], %s300
        // Predicated region
        $region45: #{tpu_custom_call.1} parent=43 // pred_check
          %p302 = pneg %p59
        $region46: #{tpu_custom_call.1} parent=43 // pred_check_branch
          %304 = sbr.rel (%p302) target = $region48
        $region47: #{tpu_custom_call.1} parent=43 // pred_region
          %305 = dma.done %s298, 128
        $region48: #{tpu_custom_call.1} parent=43 // pred_fallthru
          _
        %s306 = sand.u32 %s74, 1
        %s307 = scalar_lea.sflag [#allocation7], %s306
        %s308 = sand.u32 %s74, 1
        %s309 = smul.addr %s308, 8
        %s310 = scalar_lea.vmem [#allocation6], %s309
        // Predicated region
        $region49: #{tpu_custom_call.1} parent=43 // pred_check
          %p311 = pneg %p87
        $region50: #{tpu_custom_call.1} parent=43 // pred_check_branch
          %313 = sbr.rel (%p311) target = $region52
        $region51: #{tpu_custom_call.1} parent=43 // pred_region
          %314 = dma.done %s307, 128
        $region52: #{tpu_custom_call.1} parent=43 // pred_fallthru
          _
        %s315 = sand.u32 %s46, 1
        %s316 = scalar_lea.sflag [#allocation4], %s315
        %s317 = sand.u32 %s46, 1
        %s318 = smul.addr %s317, 8
        %s319 = scalar_lea.vmem [#allocation3], %s318
        %p320 = pneg %p59
        %p321 = pneg %p56
        %s322 = sand.u32 %s74, 1
        %s323 = scalar_lea.sflag [#allocation7], %s322
        %s324 = sand.u32 %s74, 1
        %s325 = smul.addr %s324, 8
        %s326 = scalar_lea.vmem [#allocation6], %s325
        %p327 = pneg %p87
        %p328 = pneg %p84
        %p329 = scmp.lt.s32.totalorder %s30, 1
        %s330 = scalar_select %p329, %s30, 1
        %s331 = smul.addr %s330, 8
        %s332 = scalar_lea.vmem %s2, %s331
        %p333 = pneg %p113
        %p334 = pneg %p110
        %p335 = scmp.lt.s32.totalorder %s30, 1
        %s336 = scalar_select %p335, %s30, 1
        %p337 = scmp.lt.s32.totalorder %s31, 0
        %s338 = scalar_select %p337, %s31, 0
        %s339 = sadd.s32 %s338, %s336
        %s340 = smul.addr %s339, 8
        %s341 = scalar_lea.vmem %s3, %s340
        %p342 = pneg %p141
        %p343 = pneg %p138
        %p344 = pneg %p162
        %p345 = pneg %p159
        %p346 = pneg %p183
        %p347 = pneg %p180
        %p348 = pneg %p211
        %p349 = pneg %p208
        %s350 = sand.u32 %s198, 1
        %s351 = scalar_lea.sflag [#allocation5], %s350
        %s352 = sand.u32 %s198, 1
        %s353 = smul.addr %s352, 8
        %s354 = scalar_lea.vmem [#allocation8], %s353
        %p355 = scmp.lt.s32.totalorder %s30, 1
        %s356 = scalar_select %p355, %s30, 1
        %s357 = smul.addr %s356, 8
        %s358 = scalar_lea.vmem %s2, %s357
        %p359 = scmp.lt.s32.totalorder %s30, 1
        %s360 = scalar_select %p359, %s30, 1
        %p361 = scmp.lt.s32.totalorder %s31, 0
        %s362 = scalar_select %p361, %s31, 0
        %s363 = sadd.s32 %s362, %s360
        %s364 = smul.addr %s363, 8
        %s365 = scalar_lea.vmem %s3, %s364
        %p367 = scmp.eq.s32.totalorder %s31, 0
        // Predicated region
        $region53: #{tpu_custom_call.1} parent=43 // pred_check
          %p368 = pneg %p367
        $region54: #{tpu_custom_call.1} parent=43 // pred_check_branch
          %370 = sbr.rel (%p368) target = $region56
        $region55: #{tpu_custom_call.1} parent=43 // pred_region
          %v371 = vld [vmem:[%s301] sm:$0xff]
          %v372 = vpack.c.bf16 %v371, %v371
          %v373 = vld [vmem:[%s4] sm:$0xff]
          %v374 = vld [vmem:[%s4 + $0x8] sm:$0xff]
          %v375 = vld [vmem:[%s4 + $0x10] sm:$0xff]
          %v376 = vld [vmem:[%s4 + $0x18] sm:$0xff]
          %v377 = vpack.c.bf16 %v374, %v373
          %v378 = vpack.c.bf16 %v376, %v375
          %v379 = vld [vmem:[%s5] sm:$0x1]
          %v381 = vlaneseq
          %v382 = vshrl.u32 %v381, 7
          %v383 = vsub.s32 0, %v382
          %v384 = vrot.slane %v379, %v383
          %vm386 = vcmask 261120
          %v388 = vsel %vm386, %v372, 0
          %390 = vmatprep.subr.bf16.mxu0 0
          %391 = vmatpush1.bf16.msra.mxu0 0
          %392 = vmatprep.subr.bf16.mxu0 0
          %393 = vmatpush1.bf16.msra.mxu0 0
          %394 = vmatprep.subr.bf16.mxu0 0
          %395 = vmatpush1.bf16.msra.mxu0 0
          %396 = vmatprep.subr.bf16.mxu0 0
          %397 = vmatpush1.bf16.msra.mxu0 0
          %398 = vmatprep.subr.bf16.mxu0 0
          %399 = vmatpush1.bf16.msra.mxu0 0
          %400 = vmatprep.subr.bf16.mxu0 0
          %401 = vmatpush1.bf16.msra.mxu0 0
          %402 = vmatprep.subr.bf16.mxu0 0
          %403 = vmatpush1.bf16.msra.mxu0 %v378
          %404 = vmatprep.subr.bf16.mxu0 0
          %405 = vmatpush1.bf16.msra.mxu0 %v377
          %406 = vmatprep.subr.bf16.mxu0 0
          %407 = vmatpush2.bf16.msra.mxu0 0
          %408 = vmatprep.subr.bf16.mxu0 0
          %409 = vmatpush2.bf16.msra.mxu0 0
          %410 = vmatprep.subr.bf16.mxu0 0
          %411 = vmatpush2.bf16.msra.mxu0 0
          %412 = vmatprep.subr.bf16.mxu0 0
          %413 = vmatpush2.bf16.msra.mxu0 0
          %414 = vmatprep.subr.bf16.mxu0 0
          %415 = vmatpush2.bf16.msra.mxu0 0
          %416 = vmatprep.subr.bf16.mxu0 0
          %417 = vmatpush2.bf16.msra.mxu0 0
          %418 = vmatprep.subr.bf16.mxu0 0
          %419 = vmatpush2.bf16.msra.mxu0 0
          %420 = vmatprep.subr.bf16.mxu0 0
          %421 = vmatpush2.bf16.msra.mxu0 0
          %422 = vmatprep.mubr.bf16.mxu0 0
          %423 = vmatmul.mubr.bf16.gmra.mxu0 %v388
          %v424 = vpop.f32.mrf.mxu0
          %v425 = vadd.f32 %v384, %v424
          %v426 = vpop.f32.mrf.mxu0
          %v427 = vpop.f32.mrf.mxu0
          %v428 = vpop.f32.mrf.mxu0
          %429 = vdwg.mxu0
          %430 = vst [vmem:[#allocation2] sm:$0xff] %v425
        $region56: #{tpu_custom_call.1} parent=43 // pred_fallthru
          _
        %v431 = vld [vmem:[%s358] sm:$0xff]
        %v432 = vld [vmem:[#allocation2] sm:$0xff]
        %434 = vset.pattern.permute.xlu0 0
        %435 = vperm.xlu0 %434, %v431
        %v436 = vpop.permute.xlu0 %435
        %v438 = vmul.f32 %v432, %v436
        %v439 = vpack.c.bf16 %v438, %v438
        %v440 = vld [vmem:[%s310] sm:$0xff]
        %v441 = vpack.c.bf16 %v440, %v440
        %vm442 = vcmask 64512
        %v444 = vsel %vm442, %v441, 0
        %vm446 = vcmask 1043456
        %v448 = vsel %vm446, %v439, 0
        %450 = vmatprep.subr.bf16.mxu0 0
        %451 = vmatpush1.bf16.msra.mxu0 0
        %452 = vmatprep.subr.bf16.mxu0 0
        %453 = vmatpush1.bf16.msra.mxu0 0
        %454 = vmatprep.subr.bf16.mxu0 0
        %455 = vmatpush1.bf16.msra.mxu0 0
        %456 = vmatprep.subr.bf16.mxu0 0
        %457 = vmatpush1.bf16.msra.mxu0 0
        %458 = vmatprep.subr.bf16.mxu0 0
        %459 = vmatpush1.bf16.msra.mxu0 0
        %460 = vmatprep.subr.bf16.mxu0 0
        %461 = vmatpush1.bf16.msra.mxu0 0
        %462 = vmatprep.subr.bf16.mxu0 0
        %463 = vmatpush1.bf16.msra.mxu0 0
        %464 = vmatprep.subr.bf16.mxu0 0
        %465 = vmatpush1.bf16.msra.mxu0 %v448
        %466 = vmatprep.subr.bf16.mxu0 0
        %467 = vmatpush2.bf16.msra.mxu0 0
        %468 = vmatprep.subr.bf16.mxu0 0
        %469 = vmatpush2.bf16.msra.mxu0 0
        %470 = vmatprep.subr.bf16.mxu0 0
        %471 = vmatpush2.bf16.msra.mxu0 0
        %472 = vmatprep.subr.bf16.mxu0 0
        %473 = vmatpush2.bf16.msra.mxu0 0
        %474 = vmatprep.subr.bf16.mxu0 0
        %475 = vmatpush2.bf16.msra.mxu0 0
        %476 = vmatprep.subr.bf16.mxu0 0
        %477 = vmatpush2.bf16.msra.mxu0 0
        %478 = vmatprep.subr.bf16.mxu0 0
        %479 = vmatpush2.bf16.msra.mxu0 0
        %480 = vmatprep.subr.bf16.mxu0 0
        %481 = vmatpush2.bf16.msra.mxu0 0
        %482 = vmatprep.mubr.bf16.mxu0 0
        %483 = vmatmul.mubr.bf16.gmra.mxu0 %v444
        %v484 = vpop.f32.mrf.mxu0
        %v485 = vadd.f32 0.0, %v484
        %v486 = vpop.f32.mrf.mxu0
        %v487 = vpop.f32.mrf.mxu0
        %v488 = vpop.f32.mrf.mxu0
        %489 = vdwg.mxu0
        %s490 = smul.u32 %s31, 8
        %s491 = scalar_lea.vmem [#allocation2], %s490
        %v492 = vld [vmem:[%s491] sm:$0xff]
        %v493 = vld [vmem:[%s365] sm:$0xff]
        %495 = vset.pattern.permute.xlu0 0
        %496 = vperm.xlu0 %495, %v493
        %v497 = vpop.permute.xlu0 %496
        %v499 = vmul.f32 %v497, %v485
        %v500 = vadd.f32 %v499, %v492
        %vm501 = vcmp.ge.f32.partialorder %v500, 0.0
        %v502 = vmul.f32 %v500, 0.01
        %v503 = vsel %vm501, %v500, %v502
        %504 = vst [vmem:[%s354] sm:$0xff] %v503
        %s505 = sand.u32 %s198, 1
        %s506 = scalar_lea.sflag [#allocation5], %s505
        %s507 = sand.u32 %s198, 1
        %s508 = smul.addr %s507, 8
        %s509 = scalar_lea.vmem [#allocation8], %s508
        // Predicated region
        $region57: #{tpu_custom_call.1} parent=43 // pred_check
          %p510 = pneg %p208
        $region58: #{tpu_custom_call.1} parent=43 // pred_check_branch
          %512 = sbr.rel (%p510) target = $region60
        $region59: #{tpu_custom_call.1} parent=43 // pred_region
          %s514 = ssub.s32 128, 128
          %515 = vsyncadd %s506, %s514
          %s516 = sadd.s32 %s31, %s30
          %s517 = smul.addr %s516, 128
          %s518 = scalar_lea.hbm %s6, %s517
          %s520 = sshll.u32 %s509, 4
          %s521 = int_to_ptr.vmem [resolvable:$true] %s520
          %523 = dma.vmem_to_hbm [thread:$0]  %s521, 128, %s518, %s506
        $region60: #{tpu_custom_call.1} parent=43 // pred_fallthru
          _
      $region44: #{tpu_custom_call.1} parent=5 // pred_fallthru
        _
      %p524 = scmp.le.s32.totalorder 2, %s21
      // Predicated region
      $region61: #{tpu_custom_call.1} parent=5 // pred_check
        %p525 = pneg %p524
      $region62: #{tpu_custom_call.1} parent=5 // pred_check_branch
        %527 = sbr.rel (%p525) target = $region64
      $region63: #{tpu_custom_call.1} parent=5 // pred_region
        %s528 = ssub.s32 %s21, 2
        // Predicated region
        $region65: #{tpu_custom_call.1} parent=63 // pred_check
          %p529 = pneg %p214
        $region66: #{tpu_custom_call.1} parent=63 // pred_check_branch
          %531 = sbr.rel (%p529) target = $region68
        $region67: #{tpu_custom_call.1} parent=63 // pred_region
          %s532 = sand.u32 %s199, 1
          %s533 = scalar_lea.sflag [#allocation5], %s532
          %s534 = sand.u32 %s199, 1
          %s535 = smul.addr %s534, 8
          %s536 = scalar_lea.vmem [#allocation8], %s535
          %537 = dma.done %s533, 128
        $region68: #{tpu_custom_call.1} parent=63 // pred_fallthru
          _
      $region64: #{tpu_custom_call.1} parent=5 // pred_fallthru
        _
    $region6: #{tpu_custom_call.1} parent=1 // loop_footer
      %s25 = sadd.s32 1, %s21
    $region7: #{tpu_custom_call.1} parent=1 // loop_footer_branch
      %20 = sbr.rel target = $region3
    $region8: #{tpu_custom_call.1} parent=1 // loop_exit
      _
    %538 = vsyncpa [#allocation4], 1
    %s539 = scalar_lea.sflag [#allocation4], 1
    %540 = vsyncpa %s539, 1
    %541 = vsyncpa [#allocation7], 1
    %s542 = scalar_lea.sflag [#allocation7], 1
    %543 = vsyncpa %s542, 1
    %544 = vsyncpa [#allocation5], 1
    %s545 = scalar_lea.sflag [#allocation5], 1
    %546 = vsyncpa %s545, 1

</llo_original>
